<compile_context>
chip_gen: v5e
topology: v5e:2x2
jax: 0.10.0
libtpu: 0.0.40
codegen_flags: <defaults>
</compile_context>

<pallas_src>
import jax
import jax.numpy as jnp
from jax.experimental import pallas as pl
from jax.experimental.pallas import tpu as pltpu

_VMEM_SPEC = pl.BlockSpec(memory_space=pltpu.MemorySpace.VMEM)


def _embed(x_f32, w1, b1, w2, b2):
    """One shared-weight embedding branch: bf16 MXU matmuls, f32 epilogue."""
    x = x_f32.astype(jnp.bfloat16)             # in-kernel cast (free VPU work)
    h = jnp.dot(x, w1, preferred_element_type=jnp.float32)
    h = jnp.maximum(h + b1, 0.0)               # f32 bias + ReLU epilogue
    o = jnp.dot(h.astype(jnp.bfloat16), w2, preferred_element_type=jnp.float32)
    return o + b2


def _triplet_kernel(x1_ref, x2_ref, x3_ref, w1_ref, b1_ref, w2_ref, b2_ref,
                    o1_ref, o2_ref, o3_ref):
    # Load the shared weights once; they are DMA'd from HBM exactly once per
    # call and stay VMEM/vreg-resident for all three branches.
    w1 = w1_ref[...]
    b1 = b1_ref[...]
    w2 = w2_ref[...]
    b2 = b2_ref[...]
    o1_ref[...] = _embed(x1_ref[...], w1, b1, w2, b2).astype(o1_ref.dtype)
    o2_ref[...] = _embed(x2_ref[...], w1, b1, w2, b2).astype(o2_ref.dtype)
    o3_ref[...] = _embed(x3_ref[...], w1, b1, w2, b2).astype(o3_ref.dtype)


def _single_kernel(x_ref, w1_ref, b1_ref, w2_ref, b2_ref, o_ref):
    o_ref[...] = _embed(x_ref[...], w1_ref[...], b1_ref[...], w2_ref[...],
                        b2_ref[...]).astype(o_ref.dtype)


def make_embedding_params(key, d_in, hidden, d_emb, dtype=jnp.float32):
    """PyTorch-like f32 parameters of the embedding MLP."""
    k1, k2, k3, k4 = jax.random.split(key, 4)
    w1 = jax.random.normal(k1, (d_in, hidden), dtype) * (1.0 / jnp.sqrt(d_in))
    b1 = jax.random.normal(k2, (1, hidden), dtype) * 0.01
    w2 = jax.random.normal(k3, (hidden, d_emb), dtype) * (1.0 / jnp.sqrt(hidden))
    b2 = jax.random.normal(k4, (1, d_emb), dtype) * 0.01
    return (w1, b1, w2, b2)


def prepare_params(params):
    """One-time (outside jit) weight prep: cast matmul operands to bf16, keep
    biases f32.  No lane padding at all -> W1 stays 64 KiB of HBM per call."""
    w1, b1, w2, b2 = params
    return (w1.astype(jnp.bfloat16),
            b1.astype(jnp.float32).reshape(1, -1),
            w2.astype(jnp.bfloat16),
            b2.astype(jnp.float32).reshape(1, -1))


def triplet_net_forward(x1, x2, x3, prepared_params):
    """Mirror of TripletNet.forward: one shared-weight net, three inputs,
    fused into a single grid-less Pallas call (three in, three out)."""
    w1, b1, w2, b2 = prepared_params
    d_in = w1.shape[0]
    d_emb = w2.shape[1]
    B = x1.shape[0]
    xs = (x1.reshape(B, d_in), x2.reshape(B, d_in), x3.reshape(B, d_in))
    out_shape = tuple(jax.ShapeDtypeStruct((B, d_emb), jnp.float32)
                      for _ in range(3))
    return pl.pallas_call(
        _triplet_kernel,
        out_shape=out_shape,
        in_specs=[_VMEM_SPEC] * 7,
        out_specs=tuple([_VMEM_SPEC] * 3),
    )(*xs, w1, b1, w2, b2)


def get_embedding(x, prepared_params):
    """Mirror of TripletNet.get_embedding."""
    w1, b1, w2, b2 = prepared_params
    d_in = w1.shape[0]
    d_emb = w2.shape[1]
    B = x.shape[0]
    return pl.pallas_call(
        _single_kernel,
        out_shape=jax.ShapeDtypeStruct((B, d_emb), jnp.float32),
        in_specs=[_VMEM_SPEC] * 5,
        out_specs=_VMEM_SPEC,
    )(x.reshape(B, d_in), w1, b1, w2, b2)


if __name__ == "__main__":
    key = jax.random.PRNGKey(0)
    kx1, kx2, kx3, kp = jax.random.split(key, 4)

    B, C, H, W = 2, 4, 16, 16          # NCHW inputs, like the PyTorch module
    d_in = C * H * W                   # 1024 (already lane-aligned)
    hidden = 32
    d_emb = 32

    x1 = jax.random.normal(kx1, (B, C, H, W), jnp.float32)
    x2 = jax.random.normal(kx2, (B, C, H, W), jnp.float32)
    x3 = jax.random.normal(kx3, (B, C, H, W), jnp.float32)

    params_f32 = make_embedding_params(kp, d_in, hidden, d_emb)
    params = prepare_params(params_f32)   # hoisted: once, outside the jit

    fwd = jax.jit(lambda a, b, c: triplet_net_forward(a, b, c, params))
    out1, out2, out3 = fwd(x1, x2, x3)
    jax.block_until_ready((out1, out2, out3))

    assert out1.shape == (B, d_emb)
    assert out2.shape == (B, d_emb)
    assert out3.shape == (B, d_emb)

    # Reference with the same bf16-matmul / f32-accumulate recipe.
    def ref_embed(x):
        w1, b1, w2, b2 = params_f32
        xb = x.reshape(x.shape[0], -1).astype(jnp.bfloat16)
        h = jnp.dot(xb, w1.astype(jnp.bfloat16),
                    preferred_element_type=jnp.float32) + b1
        h = jnp.maximum(h, 0.0)
        o = jnp.dot(h.astype(jnp.bfloat16), w2.astype(jnp.bfloat16),
                    preferred_element_type=jnp.float32) + b2
        return o

    assert jnp.allclose(out1, ref_embed(x1), atol=2e-3, rtol=2e-3)
    assert jnp.allclose(out2, ref_embed(x2), atol=2e-3, rtol=2e-3)
    assert jnp.allclose(out3, ref_embed(x3), atol=2e-3, rtol=2e-3)

    # Also close to the pure-f32 reference (bf16 quantization tolerance).
    def ref_embed_f32(x):
        w1, b1, w2, b2 = params_f32
        h = jnp.maximum(x.reshape(x.shape[0], -1) @ w1 + b1, 0.0)
        return h @ w2 + b2

    assert jnp.allclose(out1, ref_embed_f32(x1), atol=5e-2, rtol=5e-2)
    assert jnp.allclose(out2, ref_embed_f32(x2), atol=5e-2, rtol=5e-2)
    assert jnp.allclose(out3, ref_embed_f32(x3), atol=5e-2, rtol=5e-2)

    # get_embedding path works and matches the triplet path.
    e1 = jax.jit(lambda a: get_embedding(a, params))(x1)
    jax.block_until_ready(e1)
    assert e1.shape == (B, d_emb)
    assert jnp.allclose(e1, out1, atol=1e-5, rtol=1e-5)

    print("KERNEL_OK")
</pallas_src>

<mosaic_0001>
module attributes {stable_mosaic.version = 11 : i64} {
  func.func @_triplet_kernel(%arg0: memref<2x1024xf32, #tpu.memory_space<vmem>>, %arg1: memref<2x1024xf32, #tpu.memory_space<vmem>>, %arg2: memref<2x1024xf32, #tpu.memory_space<vmem>>, %arg3: memref<1024x32xbf16, #tpu.memory_space<vmem>>, %arg4: memref<1x32xf32, #tpu.memory_space<vmem>>, %arg5: memref<32x32xbf16, #tpu.memory_space<vmem>>, %arg6: memref<1x32xf32, #tpu.memory_space<vmem>>, %arg7: memref<2x32xf32, #tpu.memory_space<vmem>>, %arg8: memref<2x32xf32, #tpu.memory_space<vmem>>, %arg9: memref<2x32xf32, #tpu.memory_space<vmem>>) attributes {dimension_semantics = [], scalar_prefetch = 0 : i64, scratch_operands = 0 : i64, tpu.core_type = #tpu.core_type<tc>} {
    %c0 = arith.constant 0 : index
    %c0_0 = arith.constant 0 : index
    %0 = vector.load %arg3[%c0, %c0_0] : memref<1024x32xbf16, #tpu.memory_space<vmem>>, vector<1024x32xbf16>
    %c0_1 = arith.constant 0 : index
    %c0_2 = arith.constant 0 : index
    %1 = vector.load %arg4[%c0_1, %c0_2] : memref<1x32xf32, #tpu.memory_space<vmem>>, vector<1x32xf32>
    %c0_3 = arith.constant 0 : index
    %c0_4 = arith.constant 0 : index
    %2 = vector.load %arg5[%c0_3, %c0_4] : memref<32x32xbf16, #tpu.memory_space<vmem>>, vector<32x32xbf16>
    %c0_5 = arith.constant 0 : index
    %c0_6 = arith.constant 0 : index
    %3 = vector.load %arg6[%c0_5, %c0_6] : memref<1x32xf32, #tpu.memory_space<vmem>>, vector<1x32xf32>
    %c0_7 = arith.constant 0 : index
    %c0_8 = arith.constant 0 : index
    %4 = vector.load %arg0[%c0_7, %c0_8] : memref<2x1024xf32, #tpu.memory_space<vmem>>, vector<2x1024xf32>
    %5 = arith.truncf %4 : vector<2x1024xf32> to vector<2x1024xbf16>
    %cst = arith.constant dense<0.000000e+00> : vector<2x32xf32>
    %6 = tpu.matmul %5, %0, %cst {dimension_numbers = #tpu.dot_dimension_numbers<[1], [0], [0], [1], [0, 0, 1, 1], [], []>} : vector<2x1024xbf16>, vector<1024x32xbf16>, vector<2x32xf32> -> vector<2x32xf32>
    %7 = vector.broadcast %1 : vector<1x32xf32> to vector<2x32xf32>
    %8 = arith.addf %6, %7 : vector<2x32xf32>
    %cst_9 = arith.constant 0.000000e+00 : f32
    %9 = vector.broadcast %cst_9 : f32 to vector<2x32xf32>
    %10 = arith.maximumf %8, %9 : vector<2x32xf32>
    %11 = arith.truncf %10 : vector<2x32xf32> to vector<2x32xbf16>
    %cst_10 = arith.constant dense<0.000000e+00> : vector<2x32xf32>
    %12 = tpu.matmul %11, %2, %cst_10 {dimension_numbers = #tpu.dot_dimension_numbers<[1], [0], [0], [1], [0, 0, 1, 1], [], []>} : vector<2x32xbf16>, vector<32x32xbf16>, vector<2x32xf32> -> vector<2x32xf32>
    %13 = vector.broadcast %3 : vector<1x32xf32> to vector<2x32xf32>
    %14 = arith.addf %12, %13 : vector<2x32xf32>
    %c0_11 = arith.constant 0 : index
    %c0_12 = arith.constant 0 : index
    %15 = vector.load %arg7[%c0_11, %c0_12] : memref<2x32xf32, #tpu.memory_space<vmem>>, vector<2x32xf32>
    tpu.vector_store %arg7[%c0_11, %c0_12], %14 {strides = array<i32>} : memref<2x32xf32, #tpu.memory_space<vmem>>, vector<2x32xf32>,
    %c0_13 = arith.constant 0 : index
    %c0_14 = arith.constant 0 : index
    %16 = vector.load %arg1[%c0_13, %c0_14] : memref<2x1024xf32, #tpu.memory_space<vmem>>, vector<2x1024xf32>
    %17 = arith.truncf %16 : vector<2x1024xf32> to vector<2x1024xbf16>
    %cst_15 = arith.constant dense<0.000000e+00> : vector<2x32xf32>
    %18 = tpu.matmul %17, %0, %cst_15 {dimension_numbers = #tpu.dot_dimension_numbers<[1], [0], [0], [1], [0, 0, 1, 1], [], []>} : vector<2x1024xbf16>, vector<1024x32xbf16>, vector<2x32xf32> -> vector<2x32xf32>
    %19 = vector.broadcast %1 : vector<1x32xf32> to vector<2x32xf32>
    %20 = arith.addf %18, %19 : vector<2x32xf32>
    %cst_16 = arith.constant 0.000000e+00 : f32
    %21 = vector.broadcast %cst_16 : f32 to vector<2x32xf32>
    %22 = arith.maximumf %20, %21 : vector<2x32xf32>
    %23 = arith.truncf %22 : vector<2x32xf32> to vector<2x32xbf16>
    %cst_17 = arith.constant dense<0.000000e+00> : vector<2x32xf32>
    %24 = tpu.matmul %23, %2, %cst_17 {dimension_numbers = #tpu.dot_dimension_numbers<[1], [0], [0], [1], [0, 0, 1, 1], [], []>} : vector<2x32xbf16>, vector<32x32xbf16>, vector<2x32xf32> -> vector<2x32xf32>
    %25 = vector.broadcast %3 : vector<1x32xf32> to vector<2x32xf32>
    %26 = arith.addf %24, %25 : vector<2x32xf32>
    %c0_18 = arith.constant 0 : index
    %c0_19 = arith.constant 0 : index
    %27 = vector.load %arg8[%c0_18, %c0_19] : memref<2x32xf32, #tpu.memory_space<vmem>>, vector<2x32xf32>
    tpu.vector_store %arg8[%c0_18, %c0_19], %26 {strides = array<i32>} : memref<2x32xf32, #tpu.memory_space<vmem>>, vector<2x32xf32>,
    %c0_20 = arith.constant 0 : index
    %c0_21 = arith.constant 0 : index
    %28 = vector.load %arg2[%c0_20, %c0_21] : memref<2x1024xf32, #tpu.memory_space<vmem>>, vector<2x1024xf32>
    %29 = arith.truncf %28 : vector<2x1024xf32> to vector<2x1024xbf16>
    %cst_22 = arith.constant dense<0.000000e+00> : vector<2x32xf32>
    %30 = tpu.matmul %29, %0, %cst_22 {dimension_numbers = #tpu.dot_dimension_numbers<[1], [0], [0], [1], [0, 0, 1, 1], [], []>} : vector<2x1024xbf16>, vector<1024x32xbf16>, vector<2x32xf32> -> vector<2x32xf32>
    %31 = vector.broadcast %1 : vector<1x32xf32> to vector<2x32xf32>
    %32 = arith.addf %30, %31 : vector<2x32xf32>
    %cst_23 = arith.constant 0.000000e+00 : f32
    %33 = vector.broadcast %cst_23 : f32 to vector<2x32xf32>
    %34 = arith.maximumf %32, %33 : vector<2x32xf32>
    %35 = arith.truncf %34 : vector<2x32xf32> to vector<2x32xbf16>
    %cst_24 = arith.constant dense<0.000000e+00> : vector<2x32xf32>
    %36 = tpu.matmul %35, %2, %cst_24 {dimension_numbers = #tpu.dot_dimension_numbers<[1], [0], [0], [1], [0, 0, 1, 1], [], []>} : vector<2x32xbf16>, vector<32x32xbf16>, vector<2x32xf32> -> vector<2x32xf32>
    %37 = vector.broadcast %3 : vector<1x32xf32> to vector<2x32xf32>
    %38 = arith.addf %36, %37 : vector<2x32xf32>
    %c0_25 = arith.constant 0 : index
    %c0_26 = arith.constant 0 : index
    %39 = vector.load %arg9[%c0_25, %c0_26] : memref<2x32xf32, #tpu.memory_space<vmem>>, vector<2x32xf32>
    tpu.vector_store %arg9[%c0_25, %c0_26], %38 {strides = array<i32>} : memref<2x32xf32, #tpu.memory_space<vmem>>, vector<2x32xf32>,
    return
  }
}

</mosaic_0001>

<llo_original>
// kernel: _lambda_.1
$region0: #{_lambda_.1}
  #allocation0 [shape = 'u32[]', space=smem, size = 0x4, offset = 0x4, fixed_abs, tag = 'smem constant byte address 0x4 - core index']
  #allocation1 [shape = 'u32[72,128]{1,0:T(1,128)}', space=vmem, size = 0x9000, scoped, tag = 'internal scratch']
  %s0 = inlined_call_operand.vmem [shape: f32[2,1024], index: 0, kind: input, shape index: {}]
  %s1 = inlined_call_operand.vmem [shape: f32[2,1024], index: 1, kind: input, shape index: {}]
  %s2 = inlined_call_operand.vmem [shape: f32[2,1024], index: 2, kind: input, shape index: {}]
  %s3 = inlined_call_operand.hbm [shape: bf16[1024,32], index: 3, kind: input, shape index: {}]
  %s4 = inlined_call_operand.vmem [shape: f32[1,32], index: 4, kind: input, shape index: {}]
  %s5 = inlined_call_operand.vmem [shape: bf16[32,32], index: 5, kind: input, shape index: {}]
  %s6 = inlined_call_operand.vmem [shape: f32[1,32], index: 6, kind: input, shape index: {}]
  %s7 = inlined_call_operand.hbm [shape: f32[2,32], index: 7, kind: output, shape index: {0}]
  %s8 = inlined_call_operand.hbm [shape: f32[2,32], index: 8, kind: output, shape index: {1}]
  %s9 = inlined_call_operand.hbm [shape: f32[2,32], index: 9, kind: output, shape index: {2}]
  %10 = xla_tuple %s7, %s8, %s9
  %s11 = sld [smem:[#allocation0]]
  $region58: #{_lambda_.1} parent=0
    _
  %s13 = ssub.s32 1, %s11
  %s14 = scalar_select 0, %s13, %s11
  $region1: #{_lambda_.1} parent=0
    #allocation2 [shape = 'u8[262144]{0}', space=vmem, size = 0x40000, scoped, tag = 'input window, operand 3, single buffered']
    #allocation3 [shape = 's32[1]{0}', space=sflag, size = 0x4, scoped, tag = 'scoped memory for _lambda_.1']
    #allocation4 [shape = 's32[1]{0}', space=sflag, size = 0x4, scoped, tag = 'scoped memory for _lambda_.1']
    #allocation5 [shape = 'u8[1024]{0}', space=vmem, size = 0x400, scoped, tag = 'output window, operand 0, single buffered']
    #allocation6 [shape = 'u8[1024]{0}', space=vmem, size = 0x400, scoped, tag = 'output window, operand 1, single buffered']
    #allocation7 [shape = 's32[1]{0}', space=sflag, size = 0x4, scoped, tag = 'scoped memory for _lambda_.1']
    #allocation8 [shape = 'u8[1024]{0}', space=vmem, size = 0x400, scoped, tag = 'output window, operand 2, single buffered']
    %15 = vsyncpa [#allocation3], 0
    %16 = vsyncpa [#allocation4], 0
    %17 = vsyncpa [#allocation7], 0
    // Predicated region
    $region2: #{_lambda_.1} parent=1 // pred_check
      _
    $region3: #{_lambda_.1} parent=1 // pred_check_branch
      %19 = sbr.rel (0) target = $region5
    $region4: #{_lambda_.1} parent=1 // pred_region
      _
    $region5: #{_lambda_.1} parent=1 // pred_fallthru
      _
    // Predicated region
    $region6: #{_lambda_.1} parent=1 // pred_check
      _
    $region7: #{_lambda_.1} parent=1 // pred_check_branch
      %21 = sbr.rel (0) target = $region9
    $region8: #{_lambda_.1} parent=1 // pred_region
      _
    $region9: #{_lambda_.1} parent=1 // pred_fallthru
      _
    // Predicated region
    $region10: #{_lambda_.1} parent=1 // pred_check
      _
    $region11: #{_lambda_.1} parent=1 // pred_check_branch
      %23 = sbr.rel (0) target = $region13
    $region12: #{_lambda_.1} parent=1 // pred_region
      _
    $region13: #{_lambda_.1} parent=1 // pred_fallthru
      _
    // Predicated region
    $region14: #{_lambda_.1} parent=1 // pred_check
      _
    $region15: #{_lambda_.1} parent=1 // pred_check_branch
      %25 = sbr.rel (0) target = $region17
    $region16: #{_lambda_.1} parent=1 // pred_region
      %27 = vsyncadd [#allocation3], 0
      %s28 = sshll.u32 %s3, 4
      %s29 = int_to_ptr.hbm [resolvable:$true] %s28
      %s30 = sshll.u32 [#allocation2], 4
      %s31 = int_to_ptr.vmem [resolvable:$true] %s30
      %36 = dma.hbm_to_vmem [thread:$0]  %s29, 8192, %s31, [#allocation3], 64, 64, 4
    $region17: #{_lambda_.1} parent=1 // pred_fallthru
      _
    // Predicated region
    $region18: #{_lambda_.1} parent=1 // pred_check
      _
    $region19: #{_lambda_.1} parent=1 // pred_check_branch
      %38 = sbr.rel (0) target = $region21
    $region20: #{_lambda_.1} parent=1 // pred_region
      _
    $region21: #{_lambda_.1} parent=1 // pred_fallthru
      _
    // Predicated region
    $region22: #{_lambda_.1} parent=1 // pred_check
      _
    $region23: #{_lambda_.1} parent=1 // pred_check_branch
      %40 = sbr.rel (0) target = $region25
    $region24: #{_lambda_.1} parent=1 // pred_region
      _
    $region25: #{_lambda_.1} parent=1 // pred_fallthru
      _
    // Predicated region
    $region26: #{_lambda_.1} parent=1 // pred_check
      _
    $region27: #{_lambda_.1} parent=1 // pred_check_branch
      %42 = sbr.rel (0) target = $region29
    $region28: #{_lambda_.1} parent=1 // pred_region
      _
    $region29: #{_lambda_.1} parent=1 // pred_fallthru
      _
    // Predicated region
    $region30: #{_lambda_.1} parent=1 // pred_check
      _
    $region31: #{_lambda_.1} parent=1 // pred_check_branch
      %44 = sbr.rel (0) target = $region33
    $region32: #{_lambda_.1} parent=1 // pred_region
      %46 = dma.done [#allocation3], 8192
    $region33: #{_lambda_.1} parent=1 // pred_fallthru
      _
    %v48 = vld [vmem:[#allocation2] sm:$0xf]
    %v49 = vld [vmem:[#allocation2 + $0x4] sm:$0xf]
    %v50 = vld [vmem:[#allocation2 + $0x8] sm:$0xf]
    %v51 = vld [vmem:[#allocation2 + $0xc] sm:$0xf]
    %v52 = vld [vmem:[#allocation2 + $0x10] sm:$0xf]
    %v53 = vld [vmem:[#allocation2 + $0x14] sm:$0xf]
    %v54 = vld [vmem:[#allocation2 + $0x18] sm:$0xf]
    %v55 = vld [vmem:[#allocation2 + $0x1c] sm:$0xf]
    %v56 = vld [vmem:[#allocation2 + $0x20] sm:$0xf]
    %v57 = vld [vmem:[#allocation2 + $0x24] sm:$0xf]
    %v58 = vld [vmem:[#allocation2 + $0x28] sm:$0xf]
    %v59 = vld [vmem:[#allocation2 + $0x2c] sm:$0xf]
    %v60 = vld [vmem:[#allocation2 + $0x30] sm:$0xf]
    %v61 = vld [vmem:[#allocation2 + $0x34] sm:$0xf]
    %v62 = vld [vmem:[#allocation2 + $0x38] sm:$0xf]
    %v63 = vld [vmem:[#allocation2 + $0x3c] sm:$0xf]
    %v64 = vld [vmem:[#allocation2 + $0x40] sm:$0xf]
    %v65 = vld [vmem:[#allocation2 + $0x44] sm:$0xf]
    %v66 = vld [vmem:[#allocation2 + $0x48] sm:$0xf]
    %v67 = vld [vmem:[#allocation2 + $0x4c] sm:$0xf]
    %v68 = vld [vmem:[#allocation2 + $0x50] sm:$0xf]
    %v69 = vld [vmem:[#allocation2 + $0x54] sm:$0xf]
    %v70 = vld [vmem:[#allocation2 + $0x58] sm:$0xf]
    %v71 = vld [vmem:[#allocation2 + $0x5c] sm:$0xf]
    %v72 = vld [vmem:[#allocation2 + $0x60] sm:$0xf]
    %v73 = vld [vmem:[#allocation2 + $0x64] sm:$0xf]
    %v74 = vld [vmem:[#allocation2 + $0x68] sm:$0xf]
    %v75 = vld [vmem:[#allocation2 + $0x6c] sm:$0xf]
    %v76 = vld [vmem:[#allocation2 + $0x70] sm:$0xf]
    %v77 = vld [vmem:[#allocation2 + $0x74] sm:$0xf]
    %v78 = vld [vmem:[#allocation2 + $0x78] sm:$0xf]
    %v79 = vld [vmem:[#allocation2 + $0x7c] sm:$0xf]
    %v80 = vld [vmem:[#allocation2 + $0x80] sm:$0xf]
    %v81 = vld [vmem:[#allocation2 + $0x84] sm:$0xf]
    %v82 = vld [vmem:[#allocation2 + $0x88] sm:$0xf]
    %v83 = vld [vmem:[#allocation2 + $0x8c] sm:$0xf]
    %v84 = vld [vmem:[#allocation2 + $0x90] sm:$0xf]
    %v85 = vld [vmem:[#allocation2 + $0x94] sm:$0xf]
    %v86 = vld [vmem:[#allocation2 + $0x98] sm:$0xf]
    %v87 = vld [vmem:[#allocation2 + $0x9c] sm:$0xf]
    %v88 = vld [vmem:[#allocation2 + $0xa0] sm:$0xf]
    %v89 = vld [vmem:[#allocation2 + $0xa4] sm:$0xf]
    %v90 = vld [vmem:[#allocation2 + $0xa8] sm:$0xf]
    %v91 = vld [vmem:[#allocation2 + $0xac] sm:$0xf]
    %v92 = vld [vmem:[#allocation2 + $0xb0] sm:$0xf]
    %v93 = vld [vmem:[#allocation2 + $0xb4] sm:$0xf]
    %v94 = vld [vmem:[#allocation2 + $0xb8] sm:$0xf]
    %v95 = vld [vmem:[#allocation2 + $0xbc] sm:$0xf]
    %v96 = vld [vmem:[#allocation2 + $0xc0] sm:$0xf]
    %v97 = vld [vmem:[#allocation2 + $0xc4] sm:$0xf]
    %v98 = vld [vmem:[#allocation2 + $0xc8] sm:$0xf]
    %v99 = vld [vmem:[#allocation2 + $0xcc] sm:$0xf]
    %v100 = vld [vmem:[#allocation2 + $0xd0] sm:$0xf]
    %v101 = vld [vmem:[#allocation2 + $0xd4] sm:$0xf]
    %v102 = vld [vmem:[#allocation2 + $0xd8] sm:$0xf]
    %v103 = vld [vmem:[#allocation2 + $0xdc] sm:$0xf]
    %v104 = vld [vmem:[#allocation2 + $0xe0] sm:$0xf]
    %v105 = vld [vmem:[#allocation2 + $0xe4] sm:$0xf]
    %v106 = vld [vmem:[#allocation2 + $0xe8] sm:$0xf]
    %v107 = vld [vmem:[#allocation2 + $0xec] sm:$0xf]
    %v108 = vld [vmem:[#allocation2 + $0xf0] sm:$0xf]
    %v109 = vld [vmem:[#allocation2 + $0xf4] sm:$0xf]
    %v110 = vld [vmem:[#allocation2 + $0xf8] sm:$0xf]
    %v111 = vld [vmem:[#allocation2 + $0xfc] sm:$0xf]
    %v112 = vld [vmem:[#allocation2 + $0x100] sm:$0xf]
    %v113 = vld [vmem:[#allocation2 + $0x104] sm:$0xf]
    %v114 = vld [vmem:[#allocation2 + $0x108] sm:$0xf]
    %v115 = vld [vmem:[#allocation2 + $0x10c] sm:$0xf]
    %v116 = vld [vmem:[#allocation2 + $0x110] sm:$0xf]
    %v117 = vld [vmem:[#allocation2 + $0x114] sm:$0xf]
    %v118 = vld [vmem:[#allocation2 + $0x118] sm:$0xf]
    %v119 = vld [vmem:[#allocation2 + $0x11c] sm:$0xf]
    %v120 = vld [vmem:[#allocation2 + $0x120] sm:$0xf]
    %v121 = vld [vmem:[#allocation2 + $0x124] sm:$0xf]
    %v122 = vld [vmem:[#allocation2 + $0x128] sm:$0xf]
    %v123 = vld [vmem:[#allocation2 + $0x12c] sm:$0xf]
    %v124 = vld [vmem:[#allocation2 + $0x130] sm:$0xf]
    %v125 = vld [vmem:[#allocation2 + $0x134] sm:$0xf]
    %v126 = vld [vmem:[#allocation2 + $0x138] sm:$0xf]
    %v127 = vld [vmem:[#allocation2 + $0x13c] sm:$0xf]
    %v128 = vld [vmem:[#allocation2 + $0x140] sm:$0xf]
    %v129 = vld [vmem:[#allocation2 + $0x144] sm:$0xf]
    %v130 = vld [vmem:[#allocation2 + $0x148] sm:$0xf]
    %v131 = vld [vmem:[#allocation2 + $0x14c] sm:$0xf]
    %v132 = vld [vmem:[#allocation2 + $0x150] sm:$0xf]
    %v133 = vld [vmem:[#allocation2 + $0x154] sm:$0xf]
    %v134 = vld [vmem:[#allocation2 + $0x158] sm:$0xf]
    %v135 = vld [vmem:[#allocation2 + $0x15c] sm:$0xf]
    %v136 = vld [vmem:[#allocation2 + $0x160] sm:$0xf]
    %v137 = vld [vmem:[#allocation2 + $0x164] sm:$0xf]
    %v138 = vld [vmem:[#allocation2 + $0x168] sm:$0xf]
    %v139 = vld [vmem:[#allocation2 + $0x16c] sm:$0xf]
    %v140 = vld [vmem:[#allocation2 + $0x170] sm:$0xf]
    %v141 = vld [vmem:[#allocation2 + $0x174] sm:$0xf]
    %v142 = vld [vmem:[#allocation2 + $0x178] sm:$0xf]
    %v143 = vld [vmem:[#allocation2 + $0x17c] sm:$0xf]
    %v144 = vld [vmem:[#allocation2 + $0x180] sm:$0xf]
    %v145 = vld [vmem:[#allocation2 + $0x184] sm:$0xf]
    %v146 = vld [vmem:[#allocation2 + $0x188] sm:$0xf]
    %v147 = vld [vmem:[#allocation2 + $0x18c] sm:$0xf]
    %v148 = vld [vmem:[#allocation2 + $0x190] sm:$0xf]
    %v149 = vld [vmem:[#allocation2 + $0x194] sm:$0xf]
    %v150 = vld [vmem:[#allocation2 + $0x198] sm:$0xf]
    %v151 = vld [vmem:[#allocation2 + $0x19c] sm:$0xf]
    %v152 = vld [vmem:[#allocation2 + $0x1a0] sm:$0xf]
    %v153 = vld [vmem:[#allocation2 + $0x1a4] sm:$0xf]
    %v154 = vld [vmem:[#allocation2 + $0x1a8] sm:$0xf]
    %v155 = vld [vmem:[#allocation2 + $0x1ac] sm:$0xf]
    %v156 = vld [vmem:[#allocation2 + $0x1b0] sm:$0xf]
    %v157 = vld [vmem:[#allocation2 + $0x1b4] sm:$0xf]
    %v158 = vld [vmem:[#allocation2 + $0x1b8] sm:$0xf]
    %v159 = vld [vmem:[#allocation2 + $0x1bc] sm:$0xf]
    %v160 = vld [vmem:[#allocation2 + $0x1c0] sm:$0xf]
    %v161 = vld [vmem:[#allocation2 + $0x1c4] sm:$0xf]
    %v162 = vld [vmem:[#allocation2 + $0x1c8] sm:$0xf]
    %v163 = vld [vmem:[#allocation2 + $0x1cc] sm:$0xf]
    %v164 = vld [vmem:[#allocation2 + $0x1d0] sm:$0xf]
    %v165 = vld [vmem:[#allocation2 + $0x1d4] sm:$0xf]
    %v166 = vld [vmem:[#allocation2 + $0x1d8] sm:$0xf]
    %v167 = vld [vmem:[#allocation2 + $0x1dc] sm:$0xf]
    %v168 = vld [vmem:[#allocation2 + $0x1e0] sm:$0xf]
    %v169 = vld [vmem:[#allocation2 + $0x1e4] sm:$0xf]
    %v170 = vld [vmem:[#allocation2 + $0x1e8] sm:$0xf]
    %v171 = vld [vmem:[#allocation2 + $0x1ec] sm:$0xf]
    %v172 = vld [vmem:[#allocation2 + $0x1f0] sm:$0xf]
    %v173 = vld [vmem:[#allocation2 + $0x1f4] sm:$0xf]
    %v174 = vld [vmem:[#allocation2 + $0x1f8] sm:$0xf]
    %v175 = vld [vmem:[#allocation2 + $0x1fc] sm:$0xf]
    %v176 = vld [vmem:[%s4] sm:$0x1]
    %v177 = vld [vmem:[%s5] sm:$0xf]
    %v178 = vld [vmem:[%s5 + $0x4] sm:$0xf]
    %v179 = vld [vmem:[%s5 + $0x8] sm:$0xf]
    %v180 = vld [vmem:[%s5 + $0xc] sm:$0xf]
    %v181 = vld [vmem:[%s6] sm:$0x1]
    %v182 = vld [vmem:[%s0] sm:$0xff]
    %v183 = vld [vmem:[%s0 + $0x8] sm:$0xff]
    %186 = vst [vmem:[#allocation1] ss:$4 sm:$0xff] %v182
    %s187 = scalar_lea.vmem [#allocation1], 32
    %188 = vst [vmem:[%s187] ss:$4 sm:$0xff] %v183
    %v189 = vld.sshfl [vmem:[#allocation1] sm:$0xff pattern:$0x73625140]
    %v190 = vld.sshfl [vmem:[#allocation1 + $0x8] sm:$0xff pattern:$0x73625140]
    %v191 = vld.sshfl [vmem:[#allocation1 + $0x10] sm:$0xff pattern:$0x73625140]
    %v192 = vld.sshfl [vmem:[#allocation1 + $0x18] sm:$0xff pattern:$0x73625140]
    %v193 = vld.sshfl [vmem:[#allocation1 + $0x20] sm:$0xff pattern:$0x73625140]
    %v194 = vld.sshfl [vmem:[#allocation1 + $0x28] sm:$0xff pattern:$0x73625140]
    %v195 = vld.sshfl [vmem:[#allocation1 + $0x30] sm:$0xff pattern:$0x73625140]
    %v196 = vld.sshfl [vmem:[#allocation1 + $0x38] sm:$0xff pattern:$0x73625140]
    %v205 = vpack.c.bf16 %v189, %v189
    %v206 = vpack.c.bf16 %v190, %v190
    %v207 = vpack.c.bf16 %v191, %v191
    %v208 = vpack.c.bf16 %v192, %v192
    %v209 = vpack.c.bf16 %v193, %v193
    %v210 = vpack.c.bf16 %v194, %v194
    %v211 = vpack.c.bf16 %v195, %v195
    %v212 = vpack.c.bf16 %v196, %v196
    %v214 = vperm.slane %v176, 0
    %v344 = vunpack.c.l.b16 %v48
    %v345 = vunpack.c.l.b16 %v49
    %v346 = vunpack.c.l.b16 %v50
    %v347 = vunpack.c.l.b16 %v51
    %v348 = vunpack.c.l.b16 %v52
    %v349 = vunpack.c.l.b16 %v53
    %v350 = vunpack.c.l.b16 %v54
    %v351 = vunpack.c.l.b16 %v55
    %v352 = vunpack.c.l.b16 %v56
    %v353 = vunpack.c.l.b16 %v57
    %v354 = vunpack.c.l.b16 %v58
    %v355 = vunpack.c.l.b16 %v59
    %v356 = vunpack.c.l.b16 %v60
    %v357 = vunpack.c.l.b16 %v61
    %v358 = vunpack.c.l.b16 %v62
    %v359 = vunpack.c.l.b16 %v63
    %v360 = vunpack.c.l.b16 %v64
    %v361 = vunpack.c.l.b16 %v65
    %v362 = vunpack.c.l.b16 %v66
    %v363 = vunpack.c.l.b16 %v67
    %v364 = vunpack.c.l.b16 %v68
    %v365 = vunpack.c.l.b16 %v69
    %v366 = vunpack.c.l.b16 %v70
    %v367 = vunpack.c.l.b16 %v71
    %v368 = vunpack.c.l.b16 %v72
    %v369 = vunpack.c.l.b16 %v73
    %v370 = vunpack.c.l.b16 %v74
    %v371 = vunpack.c.l.b16 %v75
    %v372 = vunpack.c.l.b16 %v76
    %v373 = vunpack.c.l.b16 %v77
    %v374 = vunpack.c.l.b16 %v78
    %v375 = vunpack.c.l.b16 %v79
    %v376 = vunpack.c.l.b16 %v80
    %v377 = vunpack.c.l.b16 %v81
    %v378 = vunpack.c.l.b16 %v82
    %v379 = vunpack.c.l.b16 %v83
    %v380 = vunpack.c.l.b16 %v84
    %v381 = vunpack.c.l.b16 %v85
    %v382 = vunpack.c.l.b16 %v86
    %v383 = vunpack.c.l.b16 %v87
    %v384 = vunpack.c.l.b16 %v88
    %v385 = vunpack.c.l.b16 %v89
    %v386 = vunpack.c.l.b16 %v90
    %v387 = vunpack.c.l.b16 %v91
    %v388 = vunpack.c.l.b16 %v92
    %v389 = vunpack.c.l.b16 %v93
    %v390 = vunpack.c.l.b16 %v94
    %v391 = vunpack.c.l.b16 %v95
    %v392 = vunpack.c.l.b16 %v96
    %v393 = vunpack.c.l.b16 %v97
    %v394 = vunpack.c.l.b16 %v98
    %v395 = vunpack.c.l.b16 %v99
    %v396 = vunpack.c.l.b16 %v100
    %v397 = vunpack.c.l.b16 %v101
    %v398 = vunpack.c.l.b16 %v102
    %v399 = vunpack.c.l.b16 %v103
    %v400 = vunpack.c.l.b16 %v104
    %v401 = vunpack.c.l.b16 %v105
    %v402 = vunpack.c.l.b16 %v106
    %v403 = vunpack.c.l.b16 %v107
    %v404 = vunpack.c.l.b16 %v108
    %v405 = vunpack.c.l.b16 %v109
    %v406 = vunpack.c.l.b16 %v110
    %v407 = vunpack.c.l.b16 %v111
    %v408 = vunpack.c.l.b16 %v112
    %v409 = vunpack.c.l.b16 %v113
    %v410 = vunpack.c.l.b16 %v114
    %v411 = vunpack.c.l.b16 %v115
    %v412 = vunpack.c.l.b16 %v116
    %v413 = vunpack.c.l.b16 %v117
    %v414 = vunpack.c.l.b16 %v118
    %v415 = vunpack.c.l.b16 %v119
    %v416 = vunpack.c.l.b16 %v120
    %v417 = vunpack.c.l.b16 %v121
    %v418 = vunpack.c.l.b16 %v122
    %v419 = vunpack.c.l.b16 %v123
    %v420 = vunpack.c.l.b16 %v124
    %v421 = vunpack.c.l.b16 %v125
    %v422 = vunpack.c.l.b16 %v126
    %v423 = vunpack.c.l.b16 %v127
    %v424 = vunpack.c.l.b16 %v128
    %v425 = vunpack.c.l.b16 %v129
    %v426 = vunpack.c.l.b16 %v130
    %v427 = vunpack.c.l.b16 %v131
    %v428 = vunpack.c.l.b16 %v132
    %v429 = vunpack.c.l.b16 %v133
    %v430 = vunpack.c.l.b16 %v134
    %v431 = vunpack.c.l.b16 %v135
    %v432 = vunpack.c.l.b16 %v136
    %v433 = vunpack.c.l.b16 %v137
    %v434 = vunpack.c.l.b16 %v138
    %v435 = vunpack.c.l.b16 %v139
    %v436 = vunpack.c.l.b16 %v140
    %v437 = vunpack.c.l.b16 %v141
    %v438 = vunpack.c.l.b16 %v142
    %v439 = vunpack.c.l.b16 %v143
    %v440 = vunpack.c.l.b16 %v144
    %v441 = vunpack.c.l.b16 %v145
    %v442 = vunpack.c.l.b16 %v146
    %v443 = vunpack.c.l.b16 %v147
    %v444 = vunpack.c.l.b16 %v148
    %v445 = vunpack.c.l.b16 %v149
    %v446 = vunpack.c.l.b16 %v150
    %v447 = vunpack.c.l.b16 %v151
    %v448 = vunpack.c.l.b16 %v152
    %v449 = vunpack.c.l.b16 %v153
    %v450 = vunpack.c.l.b16 %v154
    %v451 = vunpack.c.l.b16 %v155
    %v452 = vunpack.c.l.b16 %v156
    %v453 = vunpack.c.l.b16 %v157
    %v454 = vunpack.c.l.b16 %v158
    %v455 = vunpack.c.l.b16 %v159
    %v456 = vunpack.c.l.b16 %v160
    %v457 = vunpack.c.l.b16 %v161
    %v458 = vunpack.c.l.b16 %v162
    %v459 = vunpack.c.l.b16 %v163
    %v460 = vunpack.c.l.b16 %v164
    %v461 = vunpack.c.l.b16 %v165
    %v462 = vunpack.c.l.b16 %v166
    %v463 = vunpack.c.l.b16 %v167
    %v464 = vunpack.c.l.b16 %v168
    %v465 = vunpack.c.l.b16 %v169
    %v466 = vunpack.c.l.b16 %v170
    %v467 = vunpack.c.l.b16 %v171
    %v468 = vunpack.c.l.b16 %v172
    %v469 = vunpack.c.l.b16 %v173
    %v470 = vunpack.c.l.b16 %v174
    %v471 = vunpack.c.l.b16 %v175
    %v472 = vpack.c.b16 %v345, %v344
    %v473 = vpack.c.b16 %v347, %v346
    %v474 = vpack.c.b16 %v349, %v348
    %v475 = vpack.c.b16 %v351, %v350
    %v476 = vpack.c.b16 %v353, %v352
    %v477 = vpack.c.b16 %v355, %v354
    %v478 = vpack.c.b16 %v357, %v356
    %v479 = vpack.c.b16 %v359, %v358
    %v480 = vpack.c.b16 %v361, %v360
    %v481 = vpack.c.b16 %v363, %v362
    %v482 = vpack.c.b16 %v365, %v364
    %v483 = vpack.c.b16 %v367, %v366
    %v484 = vpack.c.b16 %v369, %v368
    %v485 = vpack.c.b16 %v371, %v370
    %v486 = vpack.c.b16 %v373, %v372
    %v487 = vpack.c.b16 %v375, %v374
    %v488 = vpack.c.b16 %v377, %v376
    %v489 = vpack.c.b16 %v379, %v378
    %v490 = vpack.c.b16 %v381, %v380
    %v491 = vpack.c.b16 %v383, %v382
    %v492 = vpack.c.b16 %v385, %v384
    %v493 = vpack.c.b16 %v387, %v386
    %v494 = vpack.c.b16 %v389, %v388
    %v495 = vpack.c.b16 %v391, %v390
    %v496 = vpack.c.b16 %v393, %v392
    %v497 = vpack.c.b16 %v395, %v394
    %v498 = vpack.c.b16 %v397, %v396
    %v499 = vpack.c.b16 %v399, %v398
    %v500 = vpack.c.b16 %v401, %v400
    %v501 = vpack.c.b16 %v403, %v402
    %v502 = vpack.c.b16 %v405, %v404
    %v503 = vpack.c.b16 %v407, %v406
    %v504 = vpack.c.b16 %v409, %v408
    %v505 = vpack.c.b16 %v411, %v410
    %v506 = vpack.c.b16 %v413, %v412
    %v507 = vpack.c.b16 %v415, %v414
    %v508 = vpack.c.b16 %v417, %v416
    %v509 = vpack.c.b16 %v419, %v418
    %v510 = vpack.c.b16 %v421, %v420
    %v511 = vpack.c.b16 %v423, %v422
    %v512 = vpack.c.b16 %v425, %v424
    %v513 = vpack.c.b16 %v427, %v426
    %v514 = vpack.c.b16 %v429, %v428
    %v515 = vpack.c.b16 %v431, %v430
    %v516 = vpack.c.b16 %v433, %v432
    %v517 = vpack.c.b16 %v435, %v434
    %v518 = vpack.c.b16 %v437, %v436
    %v519 = vpack.c.b16 %v439, %v438
    %v520 = vpack.c.b16 %v441, %v440
    %v521 = vpack.c.b16 %v443, %v442
    %v522 = vpack.c.b16 %v445, %v444
    %v523 = vpack.c.b16 %v447, %v446
    %v524 = vpack.c.b16 %v449, %v448
    %v525 = vpack.c.b16 %v451, %v450
    %v526 = vpack.c.b16 %v453, %v452
    %v527 = vpack.c.b16 %v455, %v454
    %v528 = vpack.c.b16 %v457, %v456
    %v529 = vpack.c.b16 %v459, %v458
    %v530 = vpack.c.b16 %v461, %v460
    %v531 = vpack.c.b16 %v463, %v462
    %v532 = vpack.c.b16 %v465, %v464
    %v533 = vpack.c.b16 %v467, %v466
    %v534 = vpack.c.b16 %v469, %v468
    %v535 = vpack.c.b16 %v471, %v470
    %600 = vmatpush.bf16.msra.mxu0 %v479
    %601 = vmatpush.bf16.msra.mxu0 %v478
    %602 = vmatpush.bf16.msra.mxu0 %v477
    %603 = vmatpush.bf16.msra.mxu0 %v476
    %604 = vmatpush.bf16.msra.mxu0 %v475
    %605 = vmatpush.bf16.msra.mxu0 %v474
    %606 = vmatpush.bf16.msra.mxu0 %v473
    %607 = vmatpush.bf16.msra.mxu0 %v472
    %608 = vmatmul.bf16.gmra.mxu0 %v205
    %v609 = vpop.f32.mrf.mxu0
    %v610 = vadd.f32 %v214, %v609
    %v611 = vpop.f32.mrf.mxu0
    %612 = vdwg.mxu0
    %613 = vmatpush.bf16.msra.mxu0 %v487
    %614 = vmatpush.bf16.msra.mxu0 %v486
    %615 = vmatpush.bf16.msra.mxu0 %v485
    %616 = vmatpush.bf16.msra.mxu0 %v484
    %617 = vmatpush.bf16.msra.mxu0 %v483
    %618 = vmatpush.bf16.msra.mxu0 %v482
    %619 = vmatpush.bf16.msra.mxu0 %v481
    %620 = vmatpush.bf16.msra.mxu0 %v480
    %621 = vmatmul.bf16.gmra.mxu0 %v206
    %v622 = vpop.f32.mrf.mxu0
    %v623 = vadd.f32 %v610, %v622
    %v624 = vpop.f32.mrf.mxu0
    %625 = vdwg.mxu0
    %626 = vmatpush.bf16.msra.mxu0 %v495
    %627 = vmatpush.bf16.msra.mxu0 %v494
    %628 = vmatpush.bf16.msra.mxu0 %v493
    %629 = vmatpush.bf16.msra.mxu0 %v492
    %630 = vmatpush.bf16.msra.mxu0 %v491
    %631 = vmatpush.bf16.msra.mxu0 %v490
    %632 = vmatpush.bf16.msra.mxu0 %v489
    %633 = vmatpush.bf16.msra.mxu0 %v488
    %634 = vmatmul.bf16.gmra.mxu0 %v207
    %v635 = vpop.f32.mrf.mxu0
    %v636 = vadd.f32 %v623, %v635
    %v637 = vpop.f32.mrf.mxu0
    %638 = vdwg.mxu0
    %639 = vmatpush.bf16.msra.mxu0 %v503
    %640 = vmatpush.bf16.msra.mxu0 %v502
    %641 = vmatpush.bf16.msra.mxu0 %v501
    %642 = vmatpush.bf16.msra.mxu0 %v500
    %643 = vmatpush.bf16.msra.mxu0 %v499
    %644 = vmatpush.bf16.msra.mxu0 %v498
    %645 = vmatpush.bf16.msra.mxu0 %v497
    %646 = vmatpush.bf16.msra.mxu0 %v496
    %647 = vmatmul.bf16.gmra.mxu0 %v208
    %v648 = vpop.f32.mrf.mxu0
    %v649 = vadd.f32 %v636, %v648
    %v650 = vpop.f32.mrf.mxu0
    %651 = vdwg.mxu0
    %652 = vmatpush.bf16.msra.mxu0 %v511
    %653 = vmatpush.bf16.msra.mxu0 %v510
    %654 = vmatpush.bf16.msra.mxu0 %v509
    %655 = vmatpush.bf16.msra.mxu0 %v508
    %656 = vmatpush.bf16.msra.mxu0 %v507
    %657 = vmatpush.bf16.msra.mxu0 %v506
    %658 = vmatpush.bf16.msra.mxu0 %v505
    %659 = vmatpush.bf16.msra.mxu0 %v504
    %660 = vmatmul.bf16.gmra.mxu0 %v209
    %v661 = vpop.f32.mrf.mxu0
    %v662 = vadd.f32 %v649, %v661
    %v663 = vpop.f32.mrf.mxu0
    %664 = vdwg.mxu0
    %665 = vmatpush.bf16.msra.mxu0 %v519
    %666 = vmatpush.bf16.msra.mxu0 %v518
    %667 = vmatpush.bf16.msra.mxu0 %v517
    %668 = vmatpush.bf16.msra.mxu0 %v516
    %669 = vmatpush.bf16.msra.mxu0 %v515
    %670 = vmatpush.bf16.msra.mxu0 %v514
    %671 = vmatpush.bf16.msra.mxu0 %v513
    %672 = vmatpush.bf16.msra.mxu0 %v512
    %673 = vmatmul.bf16.gmra.mxu0 %v210
    %v674 = vpop.f32.mrf.mxu0
    %v675 = vadd.f32 %v662, %v674
    %v676 = vpop.f32.mrf.mxu0
    %677 = vdwg.mxu0
    %678 = vmatpush.bf16.msra.mxu0 %v527
    %679 = vmatpush.bf16.msra.mxu0 %v526
    %680 = vmatpush.bf16.msra.mxu0 %v525
    %681 = vmatpush.bf16.msra.mxu0 %v524
    %682 = vmatpush.bf16.msra.mxu0 %v523
    %683 = vmatpush.bf16.msra.mxu0 %v522
    %684 = vmatpush.bf16.msra.mxu0 %v521
    %685 = vmatpush.bf16.msra.mxu0 %v520
    %686 = vmatmul.bf16.gmra.mxu0 %v211
    %v687 = vpop.f32.mrf.mxu0
    %v688 = vadd.f32 %v675, %v687
    %v689 = vpop.f32.mrf.mxu0
    %690 = vdwg.mxu0
    %691 = vmatpush.bf16.msra.mxu0 %v535
    %692 = vmatpush.bf16.msra.mxu0 %v534
    %693 = vmatpush.bf16.msra.mxu0 %v533
    %694 = vmatpush.bf16.msra.mxu0 %v532
    %695 = vmatpush.bf16.msra.mxu0 %v531
    %696 = vmatpush.bf16.msra.mxu0 %v530
    %697 = vmatpush.bf16.msra.mxu0 %v529
    %698 = vmatpush.bf16.msra.mxu0 %v528
    %699 = vmatmul.bf16.gmra.mxu0 %v212
    %v700 = vpop.f32.mrf.mxu0
    %v701 = vadd.f32 %v688, %v700
    %v702 = vpop.f32.mrf.mxu0
    %703 = vdwg.mxu0
    %v704 = vmax.f32 %v701, 0.0
    %v705 = vpack.c.bf16 %v704, %v704
    %v707 = vperm.slane %v181, 0
    %v713 = vunpack.c.l.b16 %v177
    %v714 = vunpack.c.l.b16 %v178
    %v715 = vunpack.c.l.b16 %v179
    %v716 = vunpack.c.l.b16 %v180
    %v717 = vpack.c.b16 %v714, %v713
    %v718 = vpack.c.b16 %v716, %v715
    %vm721 = vcmask 261120
    %v723 = vsel %vm721, %v705, 0
    %725 = vmatpush.bf16.msra.mxu0 0
    %726 = vmatpush.bf16.msra.mxu0 0
    %727 = vmatpush.bf16.msra.mxu0 0
    %728 = vmatpush.bf16.msra.mxu0 0
    %729 = vmatpush.bf16.msra.mxu0 0
    %730 = vmatpush.bf16.msra.mxu0 0
    %731 = vmatpush.bf16.msra.mxu0 %v718
    %732 = vmatpush.bf16.msra.mxu0 %v717
    %733 = vmatmul.bf16.gmra.mxu0 %v723
    %v734 = vpop.f32.mrf.mxu0
    %v735 = vadd.f32 %v707, %v734
    %v736 = vpop.f32.mrf.mxu0
    %737 = vdwg.mxu0
    %vm738 = vcmask 254976
    %739 = vst.msk [vmem:[#allocation5] sm:$0x3] %vm738, %v735
    %v740 = vld [vmem:[%s1] sm:$0xff]
    %v741 = vld [vmem:[%s1 + $0x8] sm:$0xff]
    %744 = vst [vmem:[#allocation1] ss:$4 sm:$0xff] %v740
    %s745 = scalar_lea.vmem [#allocation1], 32
    %746 = vst [vmem:[%s745] ss:$4 sm:$0xff] %v741
    %v747 = vld.sshfl [vmem:[#allocation1] sm:$0xff pattern:$0x73625140]
    %v748 = vld.sshfl [vmem:[#allocation1 + $0x8] sm:$0xff pattern:$0x73625140]
    %v749 = vld.sshfl [vmem:[#allocation1 + $0x10] sm:$0xff pattern:$0x73625140]
    %v750 = vld.sshfl [vmem:[#allocation1 + $0x18] sm:$0xff pattern:$0x73625140]
    %v751 = vld.sshfl [vmem:[#allocation1 + $0x20] sm:$0xff pattern:$0x73625140]
    %v752 = vld.sshfl [vmem:[#allocation1 + $0x28] sm:$0xff pattern:$0x73625140]
    %v753 = vld.sshfl [vmem:[#allocation1 + $0x30] sm:$0xff pattern:$0x73625140]
    %v754 = vld.sshfl [vmem:[#allocation1 + $0x38] sm:$0xff pattern:$0x73625140]
    %v763 = vpack.c.bf16 %v747, %v747
    %v764 = vpack.c.bf16 %v748, %v748
    %v765 = vpack.c.bf16 %v749, %v749
    %v766 = vpack.c.bf16 %v750, %v750
    %v767 = vpack.c.bf16 %v751, %v751
    %v768 = vpack.c.bf16 %v752, %v752
    %v769 = vpack.c.bf16 %v753, %v753
    %v770 = vpack.c.bf16 %v754, %v754
    %771 = vmatpush.bf16.msra.mxu0 %v479
    %772 = vmatpush.bf16.msra.mxu0 %v478
    %773 = vmatpush.bf16.msra.mxu0 %v477
    %774 = vmatpush.bf16.msra.mxu0 %v476
    %775 = vmatpush.bf16.msra.mxu0 %v475
    %776 = vmatpush.bf16.msra.mxu0 %v474
    %777 = vmatpush.bf16.msra.mxu0 %v473
    %778 = vmatpush.bf16.msra.mxu0 %v472
    %779 = vmatmul.bf16.gmra.mxu0 %v763
    %v780 = vpop.f32.mrf.mxu0
    %v781 = vadd.f32 %v214, %v780
    %v782 = vpop.f32.mrf.mxu0
    %783 = vdwg.mxu0
    %784 = vmatpush.bf16.msra.mxu0 %v487
    %785 = vmatpush.bf16.msra.mxu0 %v486
    %786 = vmatpush.bf16.msra.mxu0 %v485
    %787 = vmatpush.bf16.msra.mxu0 %v484
    %788 = vmatpush.bf16.msra.mxu0 %v483
    %789 = vmatpush.bf16.msra.mxu0 %v482
    %790 = vmatpush.bf16.msra.mxu0 %v481
    %791 = vmatpush.bf16.msra.mxu0 %v480
    %792 = vmatmul.bf16.gmra.mxu0 %v764
    %v793 = vpop.f32.mrf.mxu0
    %v794 = vadd.f32 %v781, %v793
    %v795 = vpop.f32.mrf.mxu0
    %796 = vdwg.mxu0
    %797 = vmatpush.bf16.msra.mxu0 %v495
    %798 = vmatpush.bf16.msra.mxu0 %v494
    %799 = vmatpush.bf16.msra.mxu0 %v493
    %800 = vmatpush.bf16.msra.mxu0 %v492
    %801 = vmatpush.bf16.msra.mxu0 %v491
    %802 = vmatpush.bf16.msra.mxu0 %v490
    %803 = vmatpush.bf16.msra.mxu0 %v489
    %804 = vmatpush.bf16.msra.mxu0 %v488
    %805 = vmatmul.bf16.gmra.mxu0 %v765
    %v806 = vpop.f32.mrf.mxu0
    %v807 = vadd.f32 %v794, %v806
    %v808 = vpop.f32.mrf.mxu0
    %809 = vdwg.mxu0
    %810 = vmatpush.bf16.msra.mxu0 %v503
    %811 = vmatpush.bf16.msra.mxu0 %v502
    %812 = vmatpush.bf16.msra.mxu0 %v501
    %813 = vmatpush.bf16.msra.mxu0 %v500
    %814 = vmatpush.bf16.msra.mxu0 %v499
    %815 = vmatpush.bf16.msra.mxu0 %v498
    %816 = vmatpush.bf16.msra.mxu0 %v497
    %817 = vmatpush.bf16.msra.mxu0 %v496
    %818 = vmatmul.bf16.gmra.mxu0 %v766
    %v819 = vpop.f32.mrf.mxu0
    %v820 = vadd.f32 %v807, %v819
    %v821 = vpop.f32.mrf.mxu0
    %822 = vdwg.mxu0
    %823 = vmatpush.bf16.msra.mxu0 %v511
    %824 = vmatpush.bf16.msra.mxu0 %v510
    %825 = vmatpush.bf16.msra.mxu0 %v509
    %826 = vmatpush.bf16.msra.mxu0 %v508
    %827 = vmatpush.bf16.msra.mxu0 %v507
    %828 = vmatpush.bf16.msra.mxu0 %v506
    %829 = vmatpush.bf16.msra.mxu0 %v505
    %830 = vmatpush.bf16.msra.mxu0 %v504
    %831 = vmatmul.bf16.gmra.mxu0 %v767
    %v832 = vpop.f32.mrf.mxu0
    %v833 = vadd.f32 %v820, %v832
    %v834 = vpop.f32.mrf.mxu0
    %835 = vdwg.mxu0
    %836 = vmatpush.bf16.msra.mxu0 %v519
    %837 = vmatpush.bf16.msra.mxu0 %v518
    %838 = vmatpush.bf16.msra.mxu0 %v517
    %839 = vmatpush.bf16.msra.mxu0 %v516
    %840 = vmatpush.bf16.msra.mxu0 %v515
    %841 = vmatpush.bf16.msra.mxu0 %v514
    %842 = vmatpush.bf16.msra.mxu0 %v513
    %843 = vmatpush.bf16.msra.mxu0 %v512
    %844 = vmatmul.bf16.gmra.mxu0 %v768
    %v845 = vpop.f32.mrf.mxu0
    %v846 = vadd.f32 %v833, %v845
    %v847 = vpop.f32.mrf.mxu0
    %848 = vdwg.mxu0
    %849 = vmatpush.bf16.msra.mxu0 %v527
    %850 = vmatpush.bf16.msra.mxu0 %v526
    %851 = vmatpush.bf16.msra.mxu0 %v525
    %852 = vmatpush.bf16.msra.mxu0 %v524
    %853 = vmatpush.bf16.msra.mxu0 %v523
    %854 = vmatpush.bf16.msra.mxu0 %v522
    %855 = vmatpush.bf16.msra.mxu0 %v521
    %856 = vmatpush.bf16.msra.mxu0 %v520
    %857 = vmatmul.bf16.gmra.mxu0 %v769
    %v858 = vpop.f32.mrf.mxu0
    %v859 = vadd.f32 %v846, %v858
    %v860 = vpop.f32.mrf.mxu0
    %861 = vdwg.mxu0
    %862 = vmatpush.bf16.msra.mxu0 %v535
    %863 = vmatpush.bf16.msra.mxu0 %v534
    %864 = vmatpush.bf16.msra.mxu0 %v533
    %865 = vmatpush.bf16.msra.mxu0 %v532
    %866 = vmatpush.bf16.msra.mxu0 %v531
    %867 = vmatpush.bf16.msra.mxu0 %v530
    %868 = vmatpush.bf16.msra.mxu0 %v529
    %869 = vmatpush.bf16.msra.mxu0 %v528
    %870 = vmatmul.bf16.gmra.mxu0 %v770
    %v871 = vpop.f32.mrf.mxu0
    %v872 = vadd.f32 %v859, %v871
    %v873 = vpop.f32.mrf.mxu0
    %874 = vdwg.mxu0
    %v875 = vmax.f32 %v872, 0.0
    %v876 = vpack.c.bf16 %v875, %v875
    %v878 = vsel %vm721, %v876, 0
    %880 = vmatpush.bf16.msra.mxu0 0
    %881 = vmatpush.bf16.msra.mxu0 0
    %882 = vmatpush.bf16.msra.mxu0 0
    %883 = vmatpush.bf16.msra.mxu0 0
    %884 = vmatpush.bf16.msra.mxu0 0
    %885 = vmatpush.bf16.msra.mxu0 0
    %886 = vmatpush.bf16.msra.mxu0 %v718
    %887 = vmatpush.bf16.msra.mxu0 %v717
    %888 = vmatmul.bf16.gmra.mxu0 %v878
    %v889 = vpop.f32.mrf.mxu0
    %v890 = vadd.f32 %v707, %v889
    %v891 = vpop.f32.mrf.mxu0
    %892 = vdwg.mxu0
    %893 = vst.msk [vmem:[#allocation6] sm:$0x3] %vm738, %v890
    %v894 = vld [vmem:[%s2] sm:$0xff]
    %v895 = vld [vmem:[%s2 + $0x8] sm:$0xff]
    %898 = vst [vmem:[#allocation1] ss:$4 sm:$0xff] %v894
    %s899 = scalar_lea.vmem [#allocation1], 32
    %900 = vst [vmem:[%s899] ss:$4 sm:$0xff] %v895
    %v901 = vld.sshfl [vmem:[#allocation1] sm:$0xff pattern:$0x73625140]
    %v902 = vld.sshfl [vmem:[#allocation1 + $0x8] sm:$0xff pattern:$0x73625140]
    %v903 = vld.sshfl [vmem:[#allocation1 + $0x10] sm:$0xff pattern:$0x73625140]
    %v904 = vld.sshfl [vmem:[#allocation1 + $0x18] sm:$0xff pattern:$0x73625140]
    %v905 = vld.sshfl [vmem:[#allocation1 + $0x20] sm:$0xff pattern:$0x73625140]
    %v906 = vld.sshfl [vmem:[#allocation1 + $0x28] sm:$0xff pattern:$0x73625140]
    %v907 = vld.sshfl [vmem:[#allocation1 + $0x30] sm:$0xff pattern:$0x73625140]
    %v908 = vld.sshfl [vmem:[#allocation1 + $0x38] sm:$0xff pattern:$0x73625140]
    %v917 = vpack.c.bf16 %v901, %v901
    %v918 = vpack.c.bf16 %v902, %v902
    %v919 = vpack.c.bf16 %v903, %v903
    %v920 = vpack.c.bf16 %v904, %v904
    %v921 = vpack.c.bf16 %v905, %v905
    %v922 = vpack.c.bf16 %v906, %v906
    %v923 = vpack.c.bf16 %v907, %v907
    %v924 = vpack.c.bf16 %v908, %v908
    %925 = vmatpush.bf16.msra.mxu0 %v479
    %926 = vmatpush.bf16.msra.mxu0 %v478
    %927 = vmatpush.bf16.msra.mxu0 %v477
    %928 = vmatpush.bf16.msra.mxu0 %v476
    %929 = vmatpush.bf16.msra.mxu0 %v475
    %930 = vmatpush.bf16.msra.mxu0 %v474
    %931 = vmatpush.bf16.msra.mxu0 %v473
    %932 = vmatpush.bf16.msra.mxu0 %v472
    %933 = vmatmul.bf16.gmra.mxu0 %v917
    %v934 = vpop.f32.mrf.mxu0
    %v935 = vadd.f32 %v214, %v934
    %v936 = vpop.f32.mrf.mxu0
    %937 = vdwg.mxu0
    %938 = vmatpush.bf16.msra.mxu0 %v487
    %939 = vmatpush.bf16.msra.mxu0 %v486
    %940 = vmatpush.bf16.msra.mxu0 %v485
    %941 = vmatpush.bf16.msra.mxu0 %v484
    %942 = vmatpush.bf16.msra.mxu0 %v483
    %943 = vmatpush.bf16.msra.mxu0 %v482
    %944 = vmatpush.bf16.msra.mxu0 %v481
    %945 = vmatpush.bf16.msra.mxu0 %v480
    %946 = vmatmul.bf16.gmra.mxu0 %v918
    %v947 = vpop.f32.mrf.mxu0
    %v948 = vadd.f32 %v935, %v947
    %v949 = vpop.f32.mrf.mxu0
    %950 = vdwg.mxu0
    %951 = vmatpush.bf16.msra.mxu0 %v495
    %952 = vmatpush.bf16.msra.mxu0 %v494
    %953 = vmatpush.bf16.msra.mxu0 %v493
    %954 = vmatpush.bf16.msra.mxu0 %v492
    %955 = vmatpush.bf16.msra.mxu0 %v491
    %956 = vmatpush.bf16.msra.mxu0 %v490
    %957 = vmatpush.bf16.msra.mxu0 %v489
    %958 = vmatpush.bf16.msra.mxu0 %v488
    %959 = vmatmul.bf16.gmra.mxu0 %v919
    %v960 = vpop.f32.mrf.mxu0
    %v961 = vadd.f32 %v948, %v960
    %v962 = vpop.f32.mrf.mxu0
    %963 = vdwg.mxu0
    %964 = vmatpush.bf16.msra.mxu0 %v503
    %965 = vmatpush.bf16.msra.mxu0 %v502
    %966 = vmatpush.bf16.msra.mxu0 %v501
    %967 = vmatpush.bf16.msra.mxu0 %v500
    %968 = vmatpush.bf16.msra.mxu0 %v499
    %969 = vmatpush.bf16.msra.mxu0 %v498
    %970 = vmatpush.bf16.msra.mxu0 %v497
    %971 = vmatpush.bf16.msra.mxu0 %v496
    %972 = vmatmul.bf16.gmra.mxu0 %v920
    %v973 = vpop.f32.mrf.mxu0
    %v974 = vadd.f32 %v961, %v973
    %v975 = vpop.f32.mrf.mxu0
    %976 = vdwg.mxu0
    %977 = vmatpush.bf16.msra.mxu0 %v511
    %978 = vmatpush.bf16.msra.mxu0 %v510
    %979 = vmatpush.bf16.msra.mxu0 %v509
    %980 = vmatpush.bf16.msra.mxu0 %v508
    %981 = vmatpush.bf16.msra.mxu0 %v507
    %982 = vmatpush.bf16.msra.mxu0 %v506
    %983 = vmatpush.bf16.msra.mxu0 %v505
    %984 = vmatpush.bf16.msra.mxu0 %v504
    %985 = vmatmul.bf16.gmra.mxu0 %v921
    %v986 = vpop.f32.mrf.mxu0
    %v987 = vadd.f32 %v974, %v986
    %v988 = vpop.f32.mrf.mxu0
    %989 = vdwg.mxu0
    %990 = vmatpush.bf16.msra.mxu0 %v519
    %991 = vmatpush.bf16.msra.mxu0 %v518
    %992 = vmatpush.bf16.msra.mxu0 %v517
    %993 = vmatpush.bf16.msra.mxu0 %v516
    %994 = vmatpush.bf16.msra.mxu0 %v515
    %995 = vmatpush.bf16.msra.mxu0 %v514
    %996 = vmatpush.bf16.msra.mxu0 %v513
    %997 = vmatpush.bf16.msra.mxu0 %v512
    %998 = vmatmul.bf16.gmra.mxu0 %v922
    %v999 = vpop.f32.mrf.mxu0
    %v1000 = vadd.f32 %v987, %v999
    %v1001 = vpop.f32.mrf.mxu0
    %1002 = vdwg.mxu0
    %1003 = vmatpush.bf16.msra.mxu0 %v527
    %1004 = vmatpush.bf16.msra.mxu0 %v526
    %1005 = vmatpush.bf16.msra.mxu0 %v525
    %1006 = vmatpush.bf16.msra.mxu0 %v524
    %1007 = vmatpush.bf16.msra.mxu0 %v523
    %1008 = vmatpush.bf16.msra.mxu0 %v522
    %1009 = vmatpush.bf16.msra.mxu0 %v521
    %1010 = vmatpush.bf16.msra.mxu0 %v520
    %1011 = vmatmul.bf16.gmra.mxu0 %v923
    %v1012 = vpop.f32.mrf.mxu0
    %v1013 = vadd.f32 %v1000, %v1012
    %v1014 = vpop.f32.mrf.mxu0
    %1015 = vdwg.mxu0
    %1016 = vmatpush.bf16.msra.mxu0 %v535
    %1017 = vmatpush.bf16.msra.mxu0 %v534
    %1018 = vmatpush.bf16.msra.mxu0 %v533
    %1019 = vmatpush.bf16.msra.mxu0 %v532
    %1020 = vmatpush.bf16.msra.mxu0 %v531
    %1021 = vmatpush.bf16.msra.mxu0 %v530
    %1022 = vmatpush.bf16.msra.mxu0 %v529
    %1023 = vmatpush.bf16.msra.mxu0 %v528
    %1024 = vmatmul.bf16.gmra.mxu0 %v924
    %v1025 = vpop.f32.mrf.mxu0
    %v1026 = vadd.f32 %v1013, %v1025
    %v1027 = vpop.f32.mrf.mxu0
    %1028 = vdwg.mxu0
    %v1029 = vmax.f32 %v1026, 0.0
    %v1030 = vpack.c.bf16 %v1029, %v1029
    %v1032 = vsel %vm721, %v1030, 0
    %1034 = vmatpush.bf16.msra.mxu0 0
    %1035 = vmatpush.bf16.msra.mxu0 0
    %1036 = vmatpush.bf16.msra.mxu0 0
    %1037 = vmatpush.bf16.msra.mxu0 0
    %1038 = vmatpush.bf16.msra.mxu0 0
    %1039 = vmatpush.bf16.msra.mxu0 0
    %1040 = vmatpush.bf16.msra.mxu0 %v718
    %1041 = vmatpush.bf16.msra.mxu0 %v717
    %1042 = vmatmul.bf16.gmra.mxu0 %v1032
    %v1043 = vpop.f32.mrf.mxu0
    %v1044 = vadd.f32 %v707, %v1043
    %v1045 = vpop.f32.mrf.mxu0
    %1046 = vdwg.mxu0
    %1047 = vst.msk [vmem:[#allocation8] sm:$0x3] %vm738, %v1044
    // Predicated region
    $region34: #{_lambda_.1} parent=1 // pred_check
      _
    $region35: #{_lambda_.1} parent=1 // pred_check_branch
      %1049 = sbr.rel (0) target = $region37
    $region36: #{_lambda_.1} parent=1 // pred_region
      %1051 = vsyncadd [#allocation4], 0
      %s1053 = sshll.u32 [#allocation5], 4
      %s1054 = int_to_ptr.vmem [resolvable:$true] %s1053
      %s1055 = sshll.u32 %s7, 4
      %s1056 = int_to_ptr.hbm [resolvable:$true] %s1055
      %1058 = dma.vmem_to_hbm [thread:$0]  %s1054, 32, %s1056, [#allocation4]
    $region37: #{_lambda_.1} parent=1 // pred_fallthru
      _
    // Predicated region
    $region38: #{_lambda_.1} parent=1 // pred_check
      _
    $region39: #{_lambda_.1} parent=1 // pred_check_branch
      %1060 = sbr.rel (0) target = $region41
    $region40: #{_lambda_.1} parent=1 // pred_region
      %1062 = vsyncadd [#allocation7], 0
      %s1064 = sshll.u32 [#allocation6], 4
      %s1065 = int_to_ptr.vmem [resolvable:$true] %s1064
      %s1066 = sshll.u32 %s8, 4
      %s1067 = int_to_ptr.hbm [resolvable:$true] %s1066
      %1069 = dma.vmem_to_hbm [thread:$0]  %s1065, 32, %s1067, [#allocation7]
    $region41: #{_lambda_.1} parent=1 // pred_fallthru
      _
    // Predicated region
    $region42: #{_lambda_.1} parent=1 // pred_check
      _
    $region43: #{_lambda_.1} parent=1 // pred_check_branch
      %1071 = sbr.rel (0) target = $region45
    $region44: #{_lambda_.1} parent=1 // pred_region
      %1073 = vsyncadd [#allocation7], 0
      %s1075 = sshll.u32 [#allocation8], 4
      %s1076 = int_to_ptr.vmem [resolvable:$true] %s1075
      %s1077 = sshll.u32 %s9, 4
      %s1078 = int_to_ptr.hbm [resolvable:$true] %s1077
      %1080 = dma.vmem_to_hbm [thread:$0]  %s1076, 32, %s1078, [#allocation7]
    $region45: #{_lambda_.1} parent=1 // pred_fallthru
      _
    // Predicated region
    $region46: #{_lambda_.1} parent=1 // pred_check
      _
    $region47: #{_lambda_.1} parent=1 // pred_check_branch
      %1082 = sbr.rel (0) target = $region49
    $region48: #{_lambda_.1} parent=1 // pred_region
      %1084 = dma.done [#allocation4], 32
    $region49: #{_lambda_.1} parent=1 // pred_fallthru
      _
    // Predicated region
    $region50: #{_lambda_.1} parent=1 // pred_check
      _
    $region51: #{_lambda_.1} parent=1 // pred_check_branch
      %1086 = sbr.rel (0) target = $region53
    $region52: #{_lambda_.1} parent=1 // pred_region
      %1088 = dma.done [#allocation7], 32
    $region53: #{_lambda_.1} parent=1 // pred_fallthru
      _
    // Predicated region
    $region54: #{_lambda_.1} parent=1 // pred_check
      _
    $region55: #{_lambda_.1} parent=1 // pred_check_branch
      %1090 = sbr.rel (0) target = $region57
    $region56: #{_lambda_.1} parent=1 // pred_region
      %1092 = dma.done [#allocation7], 32
    $region57: #{_lambda_.1} parent=1 // pred_fallthru
      _
    %1093 = vsyncpa [#allocation3], 1
    %1094 = vsyncpa [#allocation4], 1
    %1095 = vsyncpa [#allocation7], 1

</llo_original>
